<compile_context>
chip_gen: v7x
topology: tpu7x:2x2x1
jax: 0.10.0
libtpu: 0.0.40
codegen_flags: <defaults>
</compile_context>

<pallas_src>
import math
import functools

import jax
import jax.numpy as jnp
from jax.experimental import pallas as pl
from jax.experimental.pallas import tpu as pltpu


def _round_up(x, m):
    return ((x + m - 1) // m) * m


# ----------------------------------------------------------------------------
# Tiled matmul (hyper-graph propagation)
# ----------------------------------------------------------------------------

def _matmul_kernel(a_ref, b_ref, o_ref, acc_ref):
    @pl.when(pl.program_id(2) == 0)
    def _():
        acc_ref[...] = jnp.zeros_like(acc_ref)

    acc_ref[...] += jnp.dot(a_ref[...], b_ref[...],
                            preferred_element_type=jnp.float32)

    @pl.when(pl.program_id(2) == pl.num_programs(2) - 1)
    def _():
        o_ref[...] = acc_ref[...].astype(o_ref.dtype)


def pallas_matmul(a, b, *, tile_m=512, tile_n=512, tile_k=512):
    """(M,K)@(K,N): bf16 MXU inputs, f32 accumulation, tiled + pipelined.

    Tile sizes (<=512) keep 2-input double-buffering + acc well under the
    32 MiB scoped-VMEM default on v5e/v6e and the 64 MiB physical VMEM on v7x.
    Operands are zero-padded to tile multiples; the result is sliced back.
    """
    M, K = a.shape
    K2, N = b.shape
    assert K == K2
    a = a.astype(jnp.bfloat16)
    b = b.astype(jnp.bfloat16)

    tm = min(tile_m, _round_up(M, 8))
    tk = min(tile_k, _round_up(K, 128))
    tn = min(tile_n, _round_up(N, 128))
    Mp, Kp, Np = _round_up(M, tm), _round_up(K, tk), _round_up(N, tn)

    if (Mp, Kp) != (M, K):
        a = jnp.pad(a, ((0, Mp - M), (0, Kp - K)))
    if (Kp, Np) != (K, N):
        b = jnp.pad(b, ((0, Kp - K), (0, Np - N)))

    out = pl.pallas_call(
        _matmul_kernel,
        out_shape=jax.ShapeDtypeStruct((Mp, Np), jnp.float32),
        grid=(Mp // tm, Np // tn, Kp // tk),
        in_specs=[pl.BlockSpec((tm, tk), lambda i, j, k: (i, k)),
                  pl.BlockSpec((tk, tn), lambda i, j, k: (k, j))],
        out_specs=pl.BlockSpec((tm, tn), lambda i, j, k: (i, j)),
        scratch_shapes=[pltpu.VMEM((tm, tn), jnp.float32)],
        compiler_params=pltpu.CompilerParams(
            dimension_semantics=("parallel", "parallel", "arbitrary")),
    )(a, b)
    return out[:M, :N]


# ----------------------------------------------------------------------------
# Batched self-attention (fused q/k/v projection)
# ----------------------------------------------------------------------------

def _attention_kernel(x_ref, wqkv_ref, o_ref, *, scale, emb):
    x = x_ref[...]                                    # (Bb, L, E) bf16
    w = wqkv_ref[...]                                 # (E, 3E)    bf16
    qkv = jnp.einsum('ble,ef->blf', x, w,
                     preferred_element_type=jnp.float32)  # (Bb, L, 3E)
    q = qkv[..., :emb]
    k = qkv[..., emb:2 * emb]
    v = qkv[..., 2 * emb:]
    # Contract the E axis directly (no explicit k transpose).
    dist = jnp.einsum('bqe,bke->bqk', q, k,
                      preferred_element_type=jnp.float32) * scale
    dist = jax.nn.softmax(dist, axis=-1)              # f32 elementwise (v5e-safe)
    att = jnp.einsum('bqk,bke->bqe', dist, v,
                     preferred_element_type=jnp.float32)
    o_ref[...] = att.astype(o_ref.dtype)


def pallas_self_attention(x, w_qkv, *, block_b=64):
    """SelfAttention.forward over a batch of sessions.

    x: (B, L, E).  w_qkv: (E, 3E) = concat(wq.T, wk.T, wv.T) prepared once.
    Processes `block_b` sessions per grid step; grid axis is megacore-parallel.
    """
    B, L, E = x.shape
    Bb = min(block_b, _round_up(B, 8))
    Bp = _round_up(B, Bb)
    xb = x.astype(jnp.bfloat16)
    if Bp != B:
        xb = jnp.pad(xb, ((0, Bp - B), (0, 0), (0, 0)))

    kernel = functools.partial(_attention_kernel,
                               scale=1.0 / math.sqrt(E), emb=E)
    out = pl.pallas_call(
        kernel,
        out_shape=jax.ShapeDtypeStruct((Bp, L, E), jnp.float32),
        grid=(Bp // Bb,),
        in_specs=[pl.BlockSpec((Bb, L, E), lambda b: (b, 0, 0)),
                  pl.BlockSpec((E, 3 * E), lambda b: (0, 0))],
        out_specs=pl.BlockSpec((Bb, L, E), lambda b: (b, 0, 0)),
        compiler_params=pltpu.CompilerParams(
            dimension_semantics=("parallel",)),
    )(xb, w_qkv)
    return out[:B]


# ----------------------------------------------------------------------------
# Session-embedding fusion head (tiled over sessions, no lane concat)
# ----------------------------------------------------------------------------

def _sess_fuse_kernel(pos_ref, ah_ref, ac_ref, hs_ref, sh_ref, m_ref,
                      w1p_ref, w1h_ref, w1c_ref, w2_ref,
                      g1w_ref, g1b_ref, g2w_ref, o_ref):
    pos = pos_ref[...]                                # (L, E)
    ah = ah_ref[...]                                  # (Bb, L, E)
    ac = ac_ref[...]                                  # (Bb, L, E)
    hs = hs_ref[...]                                  # (Bb, E)
    sh = sh_ref[...]                                  # (Bb, L, E)
    m = m_ref[...]                                    # (Bb, L)

    # nh = [pos | ah | ac] @ w1 without the (Bb, L, 3E) concat: w1 is split
    # into three (E, E) slices and the partial products are accumulated.
    nh_pos = jnp.dot(pos, w1p_ref[...],
                     preferred_element_type=jnp.float32)          # (L, E)
    nh = (nh_pos[None, :, :]
          + jnp.einsum('ble,ef->blf', ah, w1h_ref[...],
                       preferred_element_type=jnp.float32)
          + jnp.einsum('ble,ef->blf', ac, w1c_ref[...],
                       preferred_element_type=jnp.float32))
    nh = jnp.tanh(nh)

    glu = (jnp.einsum('ble,ef->blf', nh, g1w_ref[...],
                      preferred_element_type=jnp.float32)
           + g1b_ref[...][None, :, :]
           + jnp.dot(hs, g2w_ref[...],
                     preferred_element_type=jnp.float32)[:, None, :])
    nh = jax.nn.sigmoid(glu)

    beta = jnp.sum(nh * w2_ref[...][None, :, :], axis=-1,
                   keepdims=True)                                  # (Bb, L, 1)
    beta = beta * m[:, :, None]
    o_ref[...] = jnp.sum(beta * sh, axis=1)                        # (Bb, E)


def pallas_sess_fuse(pos_emb, att_h, att_c, hs, seq_h, mask_f, prep,
                     *, block_b=64):
    B, L, E = seq_h.shape
    Bb = min(block_b, _round_up(B, 8))
    Bp = _round_up(B, Bb)

    def pad_b(x):
        if Bp == B:
            return x
        pad = [(0, Bp - B)] + [(0, 0)] * (x.ndim - 1)
        return jnp.pad(x, pad)

    ah = pad_b(att_h)
    ac = pad_b(att_c)
    hs_p = pad_b(hs.astype(jnp.float32))
    sh_p = pad_b(seq_h.astype(jnp.float32))
    m_p = pad_b(mask_f)

    def wspec(shape):
        return pl.BlockSpec(shape, lambda b, _n=len(shape): (0,) * _n)

    bspec3 = pl.BlockSpec((Bb, L, E), lambda b: (b, 0, 0))
    bspec_be = pl.BlockSpec((Bb, E), lambda b: (b, 0))
    bspec_bl = pl.BlockSpec((Bb, L), lambda b: (b, 0))

    out = pl.pallas_call(
        _sess_fuse_kernel,
        out_shape=jax.ShapeDtypeStruct((Bp, E), jnp.float32),
        grid=(Bp // Bb,),
        in_specs=[wspec((L, E)), bspec3, bspec3, bspec_be, bspec3, bspec_bl,
                  wspec((E, E)), wspec((E, E)), wspec((E, E)), wspec((1, E)),
                  wspec((E, E)), wspec((1, E)), wspec((E, E))],
        out_specs=bspec_be,
        compiler_params=pltpu.CompilerParams(
            dimension_semantics=("parallel",)),
    )(pos_emb.astype(jnp.float32), ah, ac, hs_p, sh_p, m_p,
      prep['w1_pos'], prep['w1_item'], prep['w1_cat'], prep['w2_row'],
      prep['glu1_w_t'], prep['glu1_b_row'], prep['glu2_w_t'])
    return out[:B]


# ----------------------------------------------------------------------------
# Model (plain-JAX glue around the Pallas kernels)
# ----------------------------------------------------------------------------

def preprocess_params(params):
    """One-time weight preprocessing: transposes, qkv concat, bf16 casts."""
    E = params['glu1_b'].shape[0]
    prep = dict(params)
    prep['isa_wqkv'] = jnp.concatenate(
        [params['isa_wq'].T, params['isa_wk'].T, params['isa_wv'].T],
        axis=1).astype(jnp.bfloat16)
    prep['csa_wqkv'] = jnp.concatenate(
        [params['csa_wq'].T, params['csa_wk'].T, params['csa_wv'].T],
        axis=1).astype(jnp.bfloat16)
    prep['w1_pos'] = params['w_1'][:E].astype(jnp.float32)
    prep['w1_item'] = params['w_1'][E:2 * E].astype(jnp.float32)
    prep['w1_cat'] = params['w_1'][2 * E:].astype(jnp.float32)
    prep['w2_row'] = params['w_2'].reshape(1, E).astype(jnp.float32)
    prep['glu1_w_t'] = params['glu1_w'].T.astype(jnp.float32)
    prep['glu1_b_row'] = params['glu1_b'].reshape(1, E).astype(jnp.float32)
    prep['glu2_w_t'] = params['glu2_w'].T.astype(jnp.float32)
    return prep


def hyper_conv_forward(adjacency_bf16, embedding, layers):
    # HyperConv.forward with a dense adjacency (sparse COO densified).
    # TODO(synk): layers could be fused into one kernel keeping the full
    # embedding resident in VMEM, but each layer depends on the complete
    # previous result, so per-layer tiled matmuls are used instead.
    item_embeddings = embedding
    final = embedding                               # layer 0
    for _ in range(layers):
        item_embeddings = pallas_matmul(adjacency_bf16, item_embeddings)
        final = final + item_embeddings
    return final


def generate_sess_emb(prep, item_embedding, cat_embedding, session_item,
                      session_item_cat, session_len, reversed_sess_item, mask,
                      emb_size, K):
    zeros = jnp.zeros((1, emb_size), jnp.float32)
    item_p = jnp.concatenate([zeros, item_embedding], axis=0)
    cat_p = jnp.concatenate([zeros, cat_embedding], axis=0)

    seq_h = item_p[reversed_sess_item]              # (B, L, E)
    seq_h_cat = cat_p[session_item_cat]             # (B, L, E)
    # seq_l / session_local / session_gl from the torch forward are dead code
    # w.r.t. the returned value, so they are skipped.

    hs = jnp.sum(seq_h, axis=1) / session_len       # (B, E)
    mask_f = mask.astype(jnp.float32)               # (B, L)
    L = seq_h.shape[1]
    pos_emb = prep['pos_embedding'][:L]             # (L, E)

    att_h = pallas_self_attention(seq_h, prep['isa_wqkv'])
    att_c = pallas_self_attention(seq_h_cat, prep['csa_wqkv'])

    return pallas_sess_fuse(pos_emb, att_h, att_c, hs, seq_h, mask_f, prep)


def line_conv_forward(params, D, A, session_item, session_len,
                      session_item_cat, layers, emb_size):
    # Tiny (B,B)-scale matmuls: left to XLA (Pallas launch overhead would
    # dominate at this size).
    zeros = jnp.zeros((1, emb_size), jnp.float32)
    item_p = jnp.concatenate([zeros, params['embedding']], axis=0)
    idx = session_item + session_item_cat           # matches torch reference
    seq_h1 = item_p[idx]                            # (B, L, E)
    sess = jnp.sum(seq_h1, axis=1) / session_len
    DA = jnp.dot(D, A)
    total = sess
    cur = sess
    for _ in range(layers):
        cur = jnp.dot(DA, cur)
        total = total + cur
    return total


def ssl_loss(sess_emb_hgnn, sess_emb_lgcn, corrupted):
    # Tiny O(B*E) reduction: left to XLA per perf review.
    pos = jnp.sum(sess_emb_hgnn * sess_emb_lgcn, axis=1)
    neg = jnp.sum(sess_emb_lgcn * corrupted, axis=1)
    return jnp.sum(-jnp.log(1e-8 + jax.nn.sigmoid(pos))
                   - jnp.log(1e-8 + (1.0 - jax.nn.sigmoid(neg))))


def dhcn_forward(prep, adjacency, session_item, session_len, D, A,
                 reversed_sess_item, mask, session_item_cat, *,
                 n_node, layers, beta, emb_size, K, ssl_key):
    adj_bf16 = adjacency.astype(jnp.bfloat16)       # cast once, reused per layer
    item_embeddings_hg = hyper_conv_forward(adj_bf16, prep['embedding'], layers)
    sess_emb_hgnn = generate_sess_emb(
        prep, item_embeddings_hg[:n_node], item_embeddings_hg[n_node:],
        session_item, session_item_cat, session_len, reversed_sess_item, mask,
        emb_size, K)
    session_emb_lg = line_conv_forward(prep, D, A, session_item, session_len,
                                       session_item_cat, layers, emb_size)

    # SSL: torch uses torch.randperm (non-deterministic); reproduced with a
    # fixed jax.random key for determinism.
    kr, kc = jax.random.split(ssl_key)
    perm_r = jax.random.permutation(kr, sess_emb_hgnn.shape[0])
    perm_c = jax.random.permutation(kc, sess_emb_hgnn.shape[1])
    corrupted = sess_emb_hgnn[perm_r][:, perm_c]
    con_loss = ssl_loss(sess_emb_hgnn, session_emb_lg, corrupted)

    return item_embeddings_hg[:n_node], sess_emb_hgnn, beta * con_loss


def init_params(key, n_node, c_node, emb_size):
    # DHCN.init_parameters: every parameter ~ U(-stdv, stdv), stdv = 1/sqrt(E)
    stdv = 1.0 / math.sqrt(emb_size)
    names_shapes = [
        ('embedding', (n_node + c_node, emb_size)),
        ('pos_embedding', (200, emb_size)),
        ('isa_wq', (emb_size, emb_size)),
        ('isa_wk', (emb_size, emb_size)),
        ('isa_wv', (emb_size, emb_size)),
        ('csa_wq', (emb_size, emb_size)),
        ('csa_wk', (emb_size, emb_size)),
        ('csa_wv', (emb_size, emb_size)),
        ('w_1', (3 * emb_size, emb_size)),
        ('w_2', (emb_size, 1)),
        ('w_3', (2 * emb_size, emb_size)),   # only used by dead-code branch
        ('glu1_w', (emb_size, emb_size)),
        ('glu1_b', (emb_size,)),
        ('glu2_w', (emb_size, emb_size)),
    ]
    keys = jax.random.split(key, len(names_shapes))
    return {name: jax.random.uniform(k, shape, jnp.float32, -stdv, stdv)
            for (name, shape), k in zip(names_shapes, keys)}


# ----------------------------------------------------------------------------
# Driver
# ----------------------------------------------------------------------------

if __name__ == "__main__":
    # emb_size = 128 keeps the lane axis dense (full 128-lane vregs / stores).
    n_node, c_node, emb_size = 12, 6, 128
    B, L, layers, K = 8, 8, 2, 1
    beta = 0.01

    key = jax.random.PRNGKey(0)
    (kp, ka, k_si, k_sc, k_rev, k_mask, k_d, k_a, k_ssl) = jax.random.split(key, 9)

    params = init_params(kp, n_node, c_node, emb_size)
    prep = preprocess_params(params)                 # one-time weight prep

    N_total = n_node + c_node
    # TODO(synk): original adjacency is a scipy sparse COO matrix; densified
    # here (row-normalized random) since sparse COO has no clean Pallas path.
    adj = jax.random.uniform(ka, (N_total, N_total), jnp.float32)
    adj = adj / jnp.sum(adj, axis=1, keepdims=True)

    session_item = jax.random.randint(k_si, (B, L), 1, n_node + 1)
    session_item_cat = jax.random.randint(k_sc, (B, L), 1, c_node + 1)
    reversed_sess_item = jax.random.randint(k_rev, (B, L), 1, n_node + 1)
    mask = (jax.random.uniform(k_mask, (B, L)) > 0.3).astype(jnp.int32)
    session_len = jnp.maximum(jnp.sum(mask, axis=1, keepdims=True),
                              1).astype(jnp.float32)
    D = jax.random.uniform(k_d, (B, B), jnp.float32)
    A = jax.random.uniform(k_a, (B, B), jnp.float32)

    items_hg, sess_emb_hgnn, con_loss = dhcn_forward(
        prep, adj, session_item, session_len, D, A,
        reversed_sess_item, mask, session_item_cat,
        n_node=n_node, layers=layers, beta=beta,
        emb_size=emb_size, K=K, ssl_key=k_ssl)

    jax.block_until_ready((items_hg, sess_emb_hgnn, con_loss))
    assert items_hg.shape == (n_node, emb_size)
    assert sess_emb_hgnn.shape == (B, emb_size)
    assert con_loss.shape == ()
    assert bool(jnp.isfinite(con_loss))
    print("KERNEL_OK")
</pallas_src>

<mosaic_0001>
module attributes {stable_mosaic.version = 11 : i64} {
  func.func @_matmul_kernel(%arg0: i32, %arg1: i32, %arg2: i32, %arg3: memref<24x128xbf16, #tpu.memory_space<vmem>>, %arg4: memref<128x128xbf16, #tpu.memory_space<vmem>>, %arg5: memref<24x128xf32, #tpu.memory_space<vmem>>, %arg6: memref<24x128xf32, #tpu.memory_space<vmem>>) attributes {dimension_semantics = [#tpu.dimension_semantics<parallel>, #tpu.dimension_semantics<parallel>, #tpu.dimension_semantics<arbitrary>], iteration_bounds = array<i64: 1, 1, 1>, scalar_prefetch = 0 : i64, scratch_operands = 1 : i64, tpu.core_type = #tpu.core_type<tc>, window_params = [{transform_indices = @transform_0, window_bounds = array<i64: 24, 128>}, {transform_indices = @transform_1, window_bounds = array<i64: 128, 128>}, {transform_indices = @transform_2, window_bounds = array<i64: 24, 128>}]} {
    %c0_i32 = arith.constant 0 : i32
    %0 = arith.cmpi eq, %arg2, %c0_i32 : i32
    %1 = arith.extui %0 : i1 to i32
    %c0_i32_0 = arith.constant 0 : i32
    %2 = arith.cmpi ne, %1, %c0_i32_0 : i32
    scf.if %2 {
      %cst_10 = arith.constant 0.000000e+00 : f32
      %12 = vector.broadcast %cst_10 : f32 to vector<24x128xf32>
      %c0_11 = arith.constant 0 : index
      %c0_12 = arith.constant 0 : index
      %13 = vector.load %arg6[%c0_11, %c0_12] : memref<24x128xf32, #tpu.memory_space<vmem>>, vector<24x128xf32>
      tpu.vector_store %arg6[%c0_11, %c0_12], %12 {strides = array<i32>} : memref<24x128xf32, #tpu.memory_space<vmem>>, vector<24x128xf32>,
    } else {
    }
    %c0 = arith.constant 0 : index
    %c0_1 = arith.constant 0 : index
    %3 = vector.load %arg6[%c0, %c0_1] : memref<24x128xf32, #tpu.memory_space<vmem>>, vector<24x128xf32>
    %c0_2 = arith.constant 0 : index
    %c0_3 = arith.constant 0 : index
    %4 = vector.load %arg3[%c0_2, %c0_3] : memref<24x128xbf16, #tpu.memory_space<vmem>>, vector<24x128xbf16>
    %c0_4 = arith.constant 0 : index
    %c0_5 = arith.constant 0 : index
    %5 = vector.load %arg4[%c0_4, %c0_5] : memref<128x128xbf16, #tpu.memory_space<vmem>>, vector<128x128xbf16>
    %cst = arith.constant dense<0.000000e+00> : vector<24x128xf32>
    %6 = tpu.matmul %4, %5, %cst {dimension_numbers = #tpu.dot_dimension_numbers<[1], [0], [0], [1], [0, 0, 1, 1], [], []>} : vector<24x128xbf16>, vector<128x128xbf16>, vector<24x128xf32> -> vector<24x128xf32>
    %7 = arith.addf %3, %6 : vector<24x128xf32>
    %c0_6 = arith.constant 0 : index
    %c0_7 = arith.constant 0 : index
    %8 = vector.load %arg6[%c0_6, %c0_7] : memref<24x128xf32, #tpu.memory_space<vmem>>, vector<24x128xf32>
    tpu.vector_store %arg6[%c0_6, %c0_7], %7 {strides = array<i32>} : memref<24x128xf32, #tpu.memory_space<vmem>>, vector<24x128xf32>,
    %c0_i32_8 = arith.constant 0 : i32
    %9 = arith.cmpi eq, %arg2, %c0_i32_8 : i32
    %10 = arith.extui %9 : i1 to i32
    %c0_i32_9 = arith.constant 0 : i32
    %11 = arith.cmpi ne, %10, %c0_i32_9 : i32
    scf.if %11 {
      %c0_10 = arith.constant 0 : index
      %c0_11 = arith.constant 0 : index
      %12 = vector.load %arg6[%c0_10, %c0_11] : memref<24x128xf32, #tpu.memory_space<vmem>>, vector<24x128xf32>
      %c0_12 = arith.constant 0 : index
      %c0_13 = arith.constant 0 : index
      %13 = vector.load %arg5[%c0_12, %c0_13] : memref<24x128xf32, #tpu.memory_space<vmem>>, vector<24x128xf32>
      tpu.vector_store %arg5[%c0_12, %c0_13], %12 {strides = array<i32>} : memref<24x128xf32, #tpu.memory_space<vmem>>, vector<24x128xf32>,
    } else {
    }
    return
  }
  func.func @transform_0(%arg0: i32, %arg1: i32, %arg2: i32) -> (i32, i32) {
    %c0_i32 = arith.constant 0 : i32
    return %arg0, %arg2 : i32, i32
  }
  func.func @transform_1(%arg0: i32, %arg1: i32, %arg2: i32) -> (i32, i32) {
    %c0_i32 = arith.constant 0 : i32
    return %arg2, %arg1 : i32, i32
  }
  func.func @transform_2(%arg0: i32, %arg1: i32, %arg2: i32) -> (i32, i32) {
    %c0_i32 = arith.constant 0 : i32
    return %arg0, %arg1 : i32, i32
  }
}

</mosaic_0001>

<llo_original>
// kernel: tpu_custom_call.1
$region0: #{tpu_custom_call.1}
  #allocation0 [shape = 'u32[]', space=smem, size = 0x4, offset = 0x4, fixed_abs, tag = 'smem constant byte address 0x4 - core index']
  #allocation1 [shape = 'u32[144,128]{1,0:T(1,128)}', space=vmem, size = 0x12000, scoped, tag = 'internal scratch']
  #allocation2 [shape = 'f32[24,128]{1,0:T(8,128)}', space=vmem, size = 0x3000, scoped, tag = 'scratch operand']
  %s0 = inlined_call_operand.hbm [shape: bf16[24,128], index: 0, kind: input, shape index: {}]
  %s1 = inlined_call_operand.hbm [shape: bf16[128,128], index: 1, kind: input, shape index: {}]
  %s2 = inlined_call_operand.hbm [shape: f32[24,128], index: 2, kind: output, shape index: {}]
  %s3 = sld [smem:[#allocation0]]
  $region34: #{tpu_custom_call.1} parent=0
    _
  %s5 = ssub.s32 1, %s3
  %s6 = scalar_select 0, %s5, %s3
  $region1: #{tpu_custom_call.1} parent=0
    #allocation3 [shape = 'u8[6144]{0}', space=vmem, size = 0x1800, scoped, tag = 'input window, operand 0, single buffered']
    #allocation4 [shape = 's32[1]{0}', space=sflag, size = 0x4, scoped, tag = 'scoped memory for tpu_custom_call.1']
    #allocation5 [shape = 's32[1]{0}', space=sflag, size = 0x4, scoped, tag = 'scoped memory for tpu_custom_call.1']
    #allocation6 [shape = 'u8[32768]{0}', space=vmem, size = 0x8000, scoped, tag = 'input window, operand 1, single buffered']
    #allocation7 [shape = 's32[1]{0}', space=sflag, size = 0x4, scoped, tag = 'scoped memory for tpu_custom_call.1']
    #allocation8 [shape = 'u8[12288]{0}', space=vmem, size = 0x3000, scoped, tag = 'output window, operand 0, single buffered']
    %7 = vsyncpa [#allocation4], 0
    %8 = vsyncpa [#allocation7], 0
    %9 = vsyncpa [#allocation5], 0
    // Predicated region
    $region2: #{tpu_custom_call.1} parent=1 // pred_check
      _
    $region3: #{tpu_custom_call.1} parent=1 // pred_check_branch
      %11 = sbr.rel (0) target = $region5
    $region4: #{tpu_custom_call.1} parent=1 // pred_region
      %s13 = ssub.s32 192, 192
      %14 = vsyncadd [#allocation4], %s13
      %s15 = sshll.u32 [#allocation3], 4
      %s16 = int_to_ptr.vmem [resolvable:$true] %s15
      %21 = dma.hbm_to_vmem [thread:$0]  %s0, 192, %s16, [#allocation4], 64, 64, 4
    $region5: #{tpu_custom_call.1} parent=1 // pred_fallthru
      _
    // Predicated region
    $region6: #{tpu_custom_call.1} parent=1 // pred_check
      _
    $region7: #{tpu_custom_call.1} parent=1 // pred_check_branch
      %23 = sbr.rel (0) target = $region9
    $region8: #{tpu_custom_call.1} parent=1 // pred_region
      %s25 = ssub.s32 1024, 1024
      %26 = vsyncadd [#allocation7], %s25
      %s27 = sshll.u32 [#allocation6], 4
      %s28 = int_to_ptr.vmem [resolvable:$true] %s27
      %33 = dma.hbm_to_vmem [thread:$0]  %s1, 1024, %s28, [#allocation7], 64, 64, 4
    $region9: #{tpu_custom_call.1} parent=1 // pred_fallthru
      _
    // Predicated region
    $region10: #{tpu_custom_call.1} parent=1 // pred_check
      _
    $region11: #{tpu_custom_call.1} parent=1 // pred_check_branch
      %35 = sbr.rel (0) target = $region13
    $region12: #{tpu_custom_call.1} parent=1 // pred_region
      %36 = dma.done [#allocation4], 192
    $region13: #{tpu_custom_call.1} parent=1 // pred_fallthru
      _
    // Predicated region
    $region14: #{tpu_custom_call.1} parent=1 // pred_check
      _
    $region15: #{tpu_custom_call.1} parent=1 // pred_check_branch
      %38 = sbr.rel (0) target = $region17
    $region16: #{tpu_custom_call.1} parent=1 // pred_region
      %39 = dma.done [#allocation7], 1024
    $region17: #{tpu_custom_call.1} parent=1 // pred_fallthru
      _
    %p41 = scmp.eq.s32.totalorder 0, 0
    // Predicated region
    $region18: #{tpu_custom_call.1} parent=1 // pred_check
      %p42 = pneg %p41
    $region19: #{tpu_custom_call.1} parent=1 // pred_check_branch
      %44 = sbr.rel (%p42) target = $region21
    $region20: #{tpu_custom_call.1} parent=1 // pred_region
      %45 = vst [vmem:[#allocation2] sm:$0xff] 0.0
      %46 = vst [vmem:[#allocation2 + $0x8] sm:$0xff] 0.0
      %47 = vst [vmem:[#allocation2 + $0x10] sm:$0xff] 0.0
    $region21: #{tpu_custom_call.1} parent=1 // pred_fallthru
      _
    %v48 = vld [vmem:[#allocation2] sm:$0xff]
    %v49 = vld [vmem:[#allocation2 + $0x8] sm:$0xff]
    %v50 = vld [vmem:[#allocation2 + $0x10] sm:$0xff]
    %v51 = vld [vmem:[#allocation3] sm:$0xf]
    %v52 = vld [vmem:[#allocation3 + $0x4] sm:$0xf]
    %v53 = vld [vmem:[#allocation3 + $0x8] sm:$0xf]
    %v54 = vld [vmem:[#allocation6] sm:$0xf]
    %v55 = vld [vmem:[#allocation6 + $0x4] sm:$0xf]
    %v56 = vld [vmem:[#allocation6 + $0x8] sm:$0xf]
    %v57 = vld [vmem:[#allocation6 + $0xc] sm:$0xf]
    %v58 = vld [vmem:[#allocation6 + $0x10] sm:$0xf]
    %v59 = vld [vmem:[#allocation6 + $0x14] sm:$0xf]
    %v60 = vld [vmem:[#allocation6 + $0x18] sm:$0xf]
    %v61 = vld [vmem:[#allocation6 + $0x1c] sm:$0xf]
    %v62 = vld [vmem:[#allocation6 + $0x20] sm:$0xf]
    %v63 = vld [vmem:[#allocation6 + $0x24] sm:$0xf]
    %v64 = vld [vmem:[#allocation6 + $0x28] sm:$0xf]
    %v65 = vld [vmem:[#allocation6 + $0x2c] sm:$0xf]
    %v66 = vld [vmem:[#allocation6 + $0x30] sm:$0xf]
    %v67 = vld [vmem:[#allocation6 + $0x34] sm:$0xf]
    %v68 = vld [vmem:[#allocation6 + $0x38] sm:$0xf]
    %v69 = vld [vmem:[#allocation6 + $0x3c] sm:$0xf]
    %v73 = vunpack.c.l.b16 %v51
    %v74 = vunpack.c.l.b16 %v52
    %v75 = vunpack.c.l.b16 %v53
    %v76 = vpack.c.b16 %v74, %v73
    %v77 = vpack.c.b16 %v75, %v75
    %v96 = vunpack.c.l.b16 %v54
    %v97 = vunpack.c.l.b16 %v55
    %v98 = vunpack.c.l.b16 %v56
    %v99 = vunpack.c.l.b16 %v57
    %v100 = vunpack.c.l.b16 %v58
    %v101 = vunpack.c.l.b16 %v59
    %v102 = vunpack.c.l.b16 %v60
    %v103 = vunpack.c.l.b16 %v61
    %v104 = vunpack.c.l.b16 %v62
    %v105 = vunpack.c.l.b16 %v63
    %v106 = vunpack.c.l.b16 %v64
    %v107 = vunpack.c.l.b16 %v65
    %v108 = vunpack.c.l.b16 %v66
    %v109 = vunpack.c.l.b16 %v67
    %v110 = vunpack.c.l.b16 %v68
    %v111 = vunpack.c.l.b16 %v69
    %v112 = vpack.c.b16 %v97, %v96
    %v113 = vpack.c.b16 %v99, %v98
    %v114 = vpack.c.b16 %v101, %v100
    %v115 = vpack.c.b16 %v103, %v102
    %v116 = vpack.c.b16 %v105, %v104
    %v117 = vpack.c.b16 %v107, %v106
    %v118 = vpack.c.b16 %v109, %v108
    %v119 = vpack.c.b16 %v111, %v110
    %128 = vmatprep.subr.bf16.mxu0 0
    %129 = vmatpush1.bf16.msra.mxu0 %v112
    %130 = vmatprep.subr.bf16.mxu0 0
    %131 = vmatpush1.bf16.msra.mxu0 %v113
    %132 = vmatprep.subr.bf16.mxu0 0
    %133 = vmatpush1.bf16.msra.mxu0 %v114
    %134 = vmatprep.subr.bf16.mxu0 0
    %135 = vmatpush1.bf16.msra.mxu0 %v115
    %136 = vmatprep.subr.bf16.mxu0 0
    %137 = vmatpush1.bf16.msra.mxu0 %v116
    %138 = vmatprep.subr.bf16.mxu0 0
    %139 = vmatpush1.bf16.msra.mxu0 %v117
    %140 = vmatprep.subr.bf16.mxu0 0
    %141 = vmatpush1.bf16.msra.mxu0 %v118
    %142 = vmatprep.subr.bf16.mxu0 0
    %143 = vmatpush1.bf16.msra.mxu0 %v119
    %144 = vmatprep.subr.bf16.mxu0 0
    %145 = vmatpush1.bf16.msra.mxu0 0
    %146 = vmatprep.subr.bf16.mxu0 0
    %147 = vmatpush1.bf16.msra.mxu0 0
    %148 = vmatprep.subr.bf16.mxu0 0
    %149 = vmatpush1.bf16.msra.mxu0 0
    %150 = vmatprep.subr.bf16.mxu0 0
    %151 = vmatpush1.bf16.msra.mxu0 0
    %152 = vmatprep.subr.bf16.mxu0 0
    %153 = vmatpush1.bf16.msra.mxu0 0
    %154 = vmatprep.subr.bf16.mxu0 0
    %155 = vmatpush1.bf16.msra.mxu0 0
    %156 = vmatprep.subr.bf16.mxu0 0
    %157 = vmatpush1.bf16.msra.mxu0 0
    %158 = vmatprep.subr.bf16.mxu0 0
    %159 = vmatpush1.bf16.msra.mxu0 0
    %160 = vmatprep.mubr.bf16.mxu0 0
    %161 = vmatmul.mubr.bf16.gmra.mrb[0].mxu0 %v76
    %v162 = vpop.f32.mrb[0].mxu0
    %v163 = vadd.f32 0.0, %v162
    %v164 = vpop.f32.mrb[0].mxu0
    %v165 = vpop.f32.mrb[0].mxu0
    %v166 = vadd.f32 0.0, %v165
    %v167 = vpop.f32.mrb[0].mxu0
    %168 = vmatprep.mubr.bf16.mxu0 0
    %169 = vmatmul.mubr.bf16.gmra.mrb[0].mxu0 %v77
    %v170 = vpop.f32.mrb[0].mxu0
    %v171 = vadd.f32 0.0, %v170
    %v172 = vpop.f32.mrb[0].mxu0
    %v173 = vpop.f32.mrb[0].mxu0
    %v174 = vpop.f32.mrb[0].mxu0
    %175 = vdwg.mxu0
    %v176 = vadd.f32 %v48, %v163
    %v177 = vadd.f32 %v49, %v166
    %v178 = vadd.f32 %v50, %v171
    %179 = vst [vmem:[#allocation2] sm:$0xff] %v176
    %180 = vst [vmem:[#allocation2 + $0x8] sm:$0xff] %v177
    %181 = vst [vmem:[#allocation2 + $0x10] sm:$0xff] %v178
    // Predicated region
    $region22: #{tpu_custom_call.1} parent=1 // pred_check
      %p182 = pneg %p41
    $region23: #{tpu_custom_call.1} parent=1 // pred_check_branch
      %184 = sbr.rel (%p182) target = $region25
    $region24: #{tpu_custom_call.1} parent=1 // pred_region
      %v185 = vld [vmem:[#allocation2] sm:$0xff]
      %v186 = vld [vmem:[#allocation2 + $0x8] sm:$0xff]
      %v187 = vld [vmem:[#allocation2 + $0x10] sm:$0xff]
      %188 = vst [vmem:[#allocation8] sm:$0xff] %v185
      %189 = vst [vmem:[#allocation8 + $0x8] sm:$0xff] %v186
      %190 = vst [vmem:[#allocation8 + $0x10] sm:$0xff] %v187
    $region25: #{tpu_custom_call.1} parent=1 // pred_fallthru
      _
    // Predicated region
    $region26: #{tpu_custom_call.1} parent=1 // pred_check
      _
    $region27: #{tpu_custom_call.1} parent=1 // pred_check_branch
      %192 = sbr.rel (0) target = $region29
    $region28: #{tpu_custom_call.1} parent=1 // pred_region
      %s194 = ssub.s32 384, 384
      %195 = vsyncadd [#allocation5], %s194
      %s196 = sshll.u32 [#allocation8], 4
      %s197 = int_to_ptr.vmem [resolvable:$true] %s196
      %202 = dma.vmem_to_hbm [thread:$0]  %s197, 384, %s2, [#allocation5], 128, 128, 8
    $region29: #{tpu_custom_call.1} parent=1 // pred_fallthru
      _
    // Predicated region
    $region30: #{tpu_custom_call.1} parent=1 // pred_check
      _
    $region31: #{tpu_custom_call.1} parent=1 // pred_check_branch
      %204 = sbr.rel (0) target = $region33
    $region32: #{tpu_custom_call.1} parent=1 // pred_region
      %205 = dma.done [#allocation5], 384
    $region33: #{tpu_custom_call.1} parent=1 // pred_fallthru
      _
    %206 = vsyncpa [#allocation4], 1
    %207 = vsyncpa [#allocation7], 1
    %208 = vsyncpa [#allocation5], 1

</llo_original>
